<compile_context>
chip_gen: v7x
topology: tpu7x:2x2x1
jax: 0.10.0
libtpu: 0.0.40
codegen_flags: <defaults>
</compile_context>

<pallas_src>
import functools

import jax
import jax.numpy as jnp
from jax import lax
from jax.experimental import pallas as pl
from jax.experimental.pallas import tpu as pltpu


def _encoder_kernel(x_ref, w1_ref, b1_ref, w2_ref, b2_ref, w3_ref, b3_ref,
                    o_ref, *, ngram, b_blk, seq_len):
    pad = (ngram - 1) // 2
    m = b_blk * seq_len
    hidden = o_ref.shape[-1]
    cdt = x_ref.dtype                      # MXU operand dtype (bf16 or f32)

    # (B_BLK, T, Cin) -> (M, Cin): leading-dim collapse; roll/mask/concat is
    # done in f32 (layout-safe sublane rotate + minor-dim concat), MXU
    # operands are cast to cdt just before each dot.
    x = x_ref[...].reshape(m, x_ref.shape[-1]).astype(jnp.float32)

    # Hoisted once per grid step (layer-independent): within-sequence time
    # position of every flattened row + the ngram-1 boundary 0/1 masks.
    tpos = lax.broadcasted_iota(jnp.int32, (b_blk, seq_len, 1), 1).reshape(m, 1)
    masks = {}
    for k in range(ngram):
        if k == pad:
            continue
        d = k - pad
        valid = jnp.logical_and(tpos + d >= 0, tpos + d < seq_len)
        masks[k] = valid.astype(jnp.float32)            # (M, 1) 0/1

    def conv_relu(xin, wf_ref, b_ref):
        # 'same'-padded Conv1d as ONE fused matmul with K = ngram*Cin:
        #   LHS[:, k*Cin:(k+1)*Cin] = mask_k * roll(xin, pad-k)
        #   RHS = weights reshaped to (ngram*Cin, Cout)
        # (masking the rolled input at an output row is mathematically
        # identical to masking that tap's output at the same row).
        pieces = []
        for k in range(ngram):
            if k == pad:
                pieces.append(xin)                      # centre tap: no shift
            else:
                rolled = pltpu.roll(xin, shift=(pad - k) % m, axis=0)
                pieces.append(rolled * masks[k])
        lhs = jnp.concatenate(pieces, axis=-1).astype(cdt)   # (M, ngram*Cin)
        y = jnp.dot(lhs, wf_ref[...], preferred_element_type=jnp.float32)
        return jnp.maximum(y + b_ref[...], 0.0)         # f32 bias + ReLU

    # conv1d block: Dropout(p=0, eval) -> Conv1d -> ReLU
    h0 = conv_relu(x, w1_ref, b1_ref)                   # (M, H) f32
    # transform = mlc(H, H, ngram, 2): two layers of Conv1d + ReLU
    t = conv_relu(h0, w2_ref, b2_ref)
    t = conv_relu(t, w3_ref, b3_ref)

    # skip connection, back to (B_BLK, T, H)
    o_ref[...] = (h0 + t).astype(o_ref.dtype).reshape(b_blk, seq_len, hidden)


def single_ngram_encoder(x, params, ngram, *, b_blk=None):
    """x: (B, T, D_in) -> (B, T, H).

    params = (w1, b1, w2, b2, w3, b3); w_i: (ngram, Cin, Cout), b_i: (Cout,).
    """
    B, T, D_in = x.shape
    w1, b1, w2, b2, w3, b3 = params
    H = w1.shape[2]

    if b_blk is None:
        # Target M = b_blk*T in the ~2k-8k row range (amortizes the ~0.35us
        # per-grid-step overhead, fills the MXU push stream) while staying
        # well inside v7x's 32 MiB scoped VMEM (~1.5 KiB/row working set).
        # Keep >= 2 grid steps when B >= 2 so both v7x TensorCores get work.
        target_rows, max_rows = 4096, 8192
        b_blk = max(1, min(target_rows // max(T, 1), max_rows // max(T, 1), B))
        if B >= 2:
            b_blk = min(b_blk, (B + 1) // 2)
    b_blk = max(1, int(b_blk))

    # Pad B up to a multiple of b_blk; output is sliced back.  The in-kernel
    # per-sequence boundary masks keep padded sequences from leaking into
    # real ones (mask is tied to the roll, not the tile size).
    n_blk = (B + b_blk - 1) // b_blk
    B_pad = n_blk * b_blk
    x_in = jnp.pad(x, ((0, B_pad - B), (0, 0), (0, 0))) if B_pad != B else x

    cdt = x.dtype
    # Tap-fused MXU weights: (ngram, Cin, Cout) -> (ngram*Cin, Cout), in the
    # activation dtype (bf16-friendly); biases stay f32.
    w1f = jnp.asarray(w1).reshape(ngram * D_in, H).astype(cdt)
    w2f = jnp.asarray(w2).reshape(ngram * H, H).astype(cdt)
    w3f = jnp.asarray(w3).reshape(ngram * H, H).astype(cdt)
    b1c = jnp.asarray(b1, jnp.float32).reshape(1, H)
    b2c = jnp.asarray(b2, jnp.float32).reshape(1, H)
    b3c = jnp.asarray(b3, jnp.float32).reshape(1, H)

    full = lambda shape: pl.BlockSpec(shape, lambda i: (0,) * len(shape))

    itemsize = jnp.dtype(cdt).itemsize
    cost = pl.CostEstimate(
        flops=2 * B_pad * T * ngram * (D_in * H + 2 * H * H),
        transcendentals=0,
        bytes_accessed=int(B_pad * T * (D_in + H) * itemsize
                           + ngram * (D_in + 2 * H) * H * itemsize
                           + 3 * H * 4),
    )

    kernel = functools.partial(_encoder_kernel, ngram=ngram, b_blk=b_blk,
                               seq_len=T)

    out = pl.pallas_call(
        kernel,
        out_shape=jax.ShapeDtypeStruct((B_pad, T, H), x.dtype),
        grid_spec=pltpu.PrefetchScalarGridSpec(
            num_scalar_prefetch=0,
            grid=(n_blk,),
            in_specs=[
                pl.BlockSpec((b_blk, T, D_in), lambda i: (i, 0, 0)),
                full((ngram * D_in, H)), full((1, H)),
                full((ngram * H, H)), full((1, H)),
                full((ngram * H, H)), full((1, H)),
            ],
            out_specs=pl.BlockSpec((b_blk, T, H), lambda i: (i, 0, 0)),
        ),
        compiler_params=pltpu.CompilerParams(
            dimension_semantics=("parallel",),
            vmem_limit_bytes=32 * 1024 * 1024),
        cost_estimate=cost,
    )(x_in, w1f, b1c, w2f, b2c, w3f, b3c)

    return out[:B] if B_pad != B else out


def _reference(x, params, ngram):
    """Pure-JAX reference: tap-sum conv, operands in x.dtype, f32 accumulate."""
    w1, b1, w2, b2, w3, b3 = params
    pad = (ngram - 1) // 2
    cdt = x.dtype

    def conv_relu(xb, w, b):                  # xb: (B, T, Cin)
        T = xb.shape[1]
        xp = jnp.pad(xb.astype(cdt), ((0, 0), (pad, ngram - 1 - pad), (0, 0)))
        acc = sum(jnp.einsum('bti,io->bto', xp[:, k:k + T, :],
                             w[k].astype(cdt),
                             preferred_element_type=jnp.float32)
                  for k in range(ngram))
        return jax.nn.relu(acc + jnp.asarray(b, jnp.float32).reshape(1, 1, -1))

    h0 = conv_relu(x, w1, b1)
    t = conv_relu(h0, w2, b2)
    t = conv_relu(t, w3, b3)
    return (h0 + t).astype(x.dtype)


if __name__ == "__main__":
    # Small shapes consistent with the module's forward.
    B, T = 4, 16
    D_in, H, NGRAM = 32, 32, 3

    key = jax.random.PRNGKey(0)
    kx, k1, k2, k3, kb1, kb2, kb3 = jax.random.split(key, 7)

    x = jax.random.normal(kx, (B, T, D_in), jnp.float32)

    # Deterministic synthetic parameters (weights stored as (ngram, Cin, Cout)).
    scale1 = 1.0 / jnp.sqrt(D_in * NGRAM)
    scale2 = 1.0 / jnp.sqrt(H * NGRAM)
    params = (
        jax.random.normal(k1, (NGRAM, D_in, H), jnp.float32) * scale1,
        jax.random.normal(kb1, (H,), jnp.float32) * 0.1,
        jax.random.normal(k2, (NGRAM, H, H), jnp.float32) * scale2,
        jax.random.normal(kb2, (H,), jnp.float32) * 0.1,
        jax.random.normal(k3, (NGRAM, H, H), jnp.float32) * scale2,
        jax.random.normal(kb3, (H,), jnp.float32) * 0.1,
    )

    # f32 path, auto b_blk: B=4 -> b_blk=2 -> grid=(2,), "parallel".
    out = jax.block_until_ready(single_ngram_encoder(x, params, NGRAM))
    ref = _reference(x, params, NGRAM)
    assert out.shape == (B, T, H), out.shape
    err = float(jnp.max(jnp.abs(out - ref)))
    assert err < 5e-4, err

    # Non-divisible batch: B=3 exercises the padding + output-slice path.
    x3 = x[:3]
    out3 = jax.block_until_ready(single_ngram_encoder(x3, params, NGRAM))
    ref3 = _reference(x3, params, NGRAM)
    assert out3.shape == (3, T, H), out3.shape
    err3 = float(jnp.max(jnp.abs(out3 - ref3)))
    assert err3 < 5e-4, err3

    # bf16 path: bf16 MXU operands (fused K=ngram*Cin), f32 accumulation.
    xb = x.astype(jnp.bfloat16)
    out_bf = jax.block_until_ready(single_ngram_encoder(xb, params, NGRAM))
    ref_bf = _reference(xb, params, NGRAM)
    err_bf = float(jnp.max(jnp.abs(out_bf.astype(jnp.float32)
                                   - ref_bf.astype(jnp.float32))))
    assert err_bf < 5e-2, err_bf

    print("KERNEL_OK")
</pallas_src>

<mosaic_0001>
module attributes {stable_mosaic.version = 11 : i64} {
  func.func @_encoder_kernel(%arg0: i32, %arg1: memref<2x16x32xf32, #tpu.memory_space<vmem>>, %arg2: memref<96x32xf32, #tpu.memory_space<vmem>>, %arg3: memref<1x32xf32, #tpu.memory_space<vmem>>, %arg4: memref<96x32xf32, #tpu.memory_space<vmem>>, %arg5: memref<1x32xf32, #tpu.memory_space<vmem>>, %arg6: memref<96x32xf32, #tpu.memory_space<vmem>>, %arg7: memref<1x32xf32, #tpu.memory_space<vmem>>, %arg8: memref<2x16x32xf32, #tpu.memory_space<vmem>>) attributes {dimension_semantics = [#tpu.dimension_semantics<parallel>], iteration_bounds = array<i64: 2>, scalar_prefetch = 0 : i64, scratch_operands = 0 : i64, tpu.core_type = #tpu.core_type<tc>, window_params = [{transform_indices = @transform_0, window_bounds = array<i64: 2, 16, 32>}, {pipeline_mode = #tpu.pipeline_mode<synchronous>, transform_indices = @transform_1, window_bounds = array<i64: 96, 32>}, {pipeline_mode = #tpu.pipeline_mode<synchronous>, transform_indices = @transform_2, window_bounds = array<i64: 1, 32>}, {pipeline_mode = #tpu.pipeline_mode<synchronous>, transform_indices = @transform_3, window_bounds = array<i64: 96, 32>}, {pipeline_mode = #tpu.pipeline_mode<synchronous>, transform_indices = @transform_4, window_bounds = array<i64: 1, 32>}, {pipeline_mode = #tpu.pipeline_mode<synchronous>, transform_indices = @transform_5, window_bounds = array<i64: 96, 32>}, {pipeline_mode = #tpu.pipeline_mode<synchronous>, transform_indices = @transform_6, window_bounds = array<i64: 1, 32>}, {transform_indices = @transform_7, window_bounds = array<i64: 2, 16, 32>}]} {
    %c0 = arith.constant 0 : index
    %c0_0 = arith.constant 0 : index
    %c0_1 = arith.constant 0 : index
    %0 = vector.load %arg1[%c0, %c0_0, %c0_1] : memref<2x16x32xf32, #tpu.memory_space<vmem>>, vector<2x16x32xf32>
    %1 = vector.shape_cast %0 : vector<2x16x32xf32> to vector<32x32xf32>
    %2 = tpu.iota {dimensions = array<i32: 1>} : vector<2x16x1xi32>
    %3 = vector.shape_cast %2 : vector<2x16x1xi32> to vector<32x1xi32>
    %c-1_i32 = arith.constant -1 : i32
    %4 = vector.broadcast %c-1_i32 : i32 to vector<32x1xi32>
    %5 = arith.addi %3, %4 : vector<32x1xi32>
    %c0_i32 = arith.constant 0 : i32
    %6 = vector.broadcast %c0_i32 : i32 to vector<32x1xi32>
    %7 = arith.cmpi sge, %5, %6 : vector<32x1xi32>
    %c-1_i32_2 = arith.constant -1 : i32
    %8 = vector.broadcast %c-1_i32_2 : i32 to vector<32x1xi32>
    %9 = arith.addi %3, %8 : vector<32x1xi32>
    %c16_i32 = arith.constant 16 : i32
    %10 = vector.broadcast %c16_i32 : i32 to vector<32x1xi32>
    %11 = arith.cmpi slt, %9, %10 : vector<32x1xi32>
    %12 = arith.andi %7, %11 : vector<32x1xi1>
    %13 = arith.extui %12 : vector<32x1xi1> to vector<32x1xi32>
    %14 = arith.sitofp %13 : vector<32x1xi32> to vector<32x1xf32>
    %c1_i32 = arith.constant 1 : i32
    %15 = vector.broadcast %c1_i32 : i32 to vector<32x1xi32>
    %16 = arith.addi %3, %15 : vector<32x1xi32>
    %c0_i32_3 = arith.constant 0 : i32
    %17 = vector.broadcast %c0_i32_3 : i32 to vector<32x1xi32>
    %18 = arith.cmpi sge, %16, %17 : vector<32x1xi32>
    %c1_i32_4 = arith.constant 1 : i32
    %19 = vector.broadcast %c1_i32_4 : i32 to vector<32x1xi32>
    %20 = arith.addi %3, %19 : vector<32x1xi32>
    %c16_i32_5 = arith.constant 16 : i32
    %21 = vector.broadcast %c16_i32_5 : i32 to vector<32x1xi32>
    %22 = arith.cmpi slt, %20, %21 : vector<32x1xi32>
    %23 = arith.andi %18, %22 : vector<32x1xi1>
    %24 = arith.extui %23 : vector<32x1xi1> to vector<32x1xi32>
    %25 = arith.sitofp %24 : vector<32x1xi32> to vector<32x1xf32>
    %c1_i32_6 = arith.constant 1 : i32
    %26 = tpu.dynamic_rotate %1 by %c1_i32_6 dim 0 : vector<32x32xf32>, i32 -> vector<32x32xf32>
    %27 = vector.broadcast %14 : vector<32x1xf32> to vector<32x32xf32>
    %28 = arith.mulf %26, %27 : vector<32x32xf32>
    %c31_i32 = arith.constant 31 : i32
    %29 = tpu.dynamic_rotate %1 by %c31_i32 dim 0 : vector<32x32xf32>, i32 -> vector<32x32xf32>
    %30 = vector.broadcast %25 : vector<32x1xf32> to vector<32x32xf32>
    %31 = arith.mulf %29, %30 : vector<32x32xf32>
    %32 = tpu.concatenate %28, %1, %31 in 1 : vector<32x32xf32>, vector<32x32xf32>, vector<32x32xf32> -> vector<32x96xf32>
    %c0_7 = arith.constant 0 : index
    %c0_8 = arith.constant 0 : index
    %33 = vector.load %arg2[%c0_7, %c0_8] : memref<96x32xf32, #tpu.memory_space<vmem>>, vector<96x32xf32>
    %cst = arith.constant dense<0.000000e+00> : vector<32x32xf32>
    %34 = tpu.matmul %32, %33, %cst {dimension_numbers = #tpu.dot_dimension_numbers<[1], [0], [0], [1], [0, 0, 1, 1], [], []>} : vector<32x96xf32>, vector<96x32xf32>, vector<32x32xf32> -> vector<32x32xf32>
    %c0_9 = arith.constant 0 : index
    %c0_10 = arith.constant 0 : index
    %35 = vector.load %arg3[%c0_9, %c0_10] : memref<1x32xf32, #tpu.memory_space<vmem>>, vector<1x32xf32>
    %36 = vector.broadcast %35 : vector<1x32xf32> to vector<32x32xf32>
    %37 = arith.addf %34, %36 : vector<32x32xf32>
    %cst_11 = arith.constant 0.000000e+00 : f32
    %38 = vector.broadcast %cst_11 : f32 to vector<32x32xf32>
    %39 = arith.maximumf %37, %38 : vector<32x32xf32>
    %c1_i32_12 = arith.constant 1 : i32
    %40 = tpu.dynamic_rotate %39 by %c1_i32_12 dim 0 : vector<32x32xf32>, i32 -> vector<32x32xf32>
    %41 = vector.broadcast %14 : vector<32x1xf32> to vector<32x32xf32>
    %42 = arith.mulf %40, %41 : vector<32x32xf32>
    %c31_i32_13 = arith.constant 31 : i32
    %43 = tpu.dynamic_rotate %39 by %c31_i32_13 dim 0 : vector<32x32xf32>, i32 -> vector<32x32xf32>
    %44 = vector.broadcast %25 : vector<32x1xf32> to vector<32x32xf32>
    %45 = arith.mulf %43, %44 : vector<32x32xf32>
    %46 = tpu.concatenate %42, %39, %45 in 1 : vector<32x32xf32>, vector<32x32xf32>, vector<32x32xf32> -> vector<32x96xf32>
    %c0_14 = arith.constant 0 : index
    %c0_15 = arith.constant 0 : index
    %47 = vector.load %arg4[%c0_14, %c0_15] : memref<96x32xf32, #tpu.memory_space<vmem>>, vector<96x32xf32>
    %cst_16 = arith.constant dense<0.000000e+00> : vector<32x32xf32>
    %48 = tpu.matmul %46, %47, %cst_16 {dimension_numbers = #tpu.dot_dimension_numbers<[1], [0], [0], [1], [0, 0, 1, 1], [], []>} : vector<32x96xf32>, vector<96x32xf32>, vector<32x32xf32> -> vector<32x32xf32>
    %c0_17 = arith.constant 0 : index
    %c0_18 = arith.constant 0 : index
    %49 = vector.load %arg5[%c0_17, %c0_18] : memref<1x32xf32, #tpu.memory_space<vmem>>, vector<1x32xf32>
    %50 = vector.broadcast %49 : vector<1x32xf32> to vector<32x32xf32>
    %51 = arith.addf %48, %50 : vector<32x32xf32>
    %cst_19 = arith.constant 0.000000e+00 : f32
    %52 = vector.broadcast %cst_19 : f32 to vector<32x32xf32>
    %53 = arith.maximumf %51, %52 : vector<32x32xf32>
    %c1_i32_20 = arith.constant 1 : i32
    %54 = tpu.dynamic_rotate %53 by %c1_i32_20 dim 0 : vector<32x32xf32>, i32 -> vector<32x32xf32>
    %55 = vector.broadcast %14 : vector<32x1xf32> to vector<32x32xf32>
    %56 = arith.mulf %54, %55 : vector<32x32xf32>
    %c31_i32_21 = arith.constant 31 : i32
    %57 = tpu.dynamic_rotate %53 by %c31_i32_21 dim 0 : vector<32x32xf32>, i32 -> vector<32x32xf32>
    %58 = vector.broadcast %25 : vector<32x1xf32> to vector<32x32xf32>
    %59 = arith.mulf %57, %58 : vector<32x32xf32>
    %60 = tpu.concatenate %56, %53, %59 in 1 : vector<32x32xf32>, vector<32x32xf32>, vector<32x32xf32> -> vector<32x96xf32>
    %c0_22 = arith.constant 0 : index
    %c0_23 = arith.constant 0 : index
    %61 = vector.load %arg6[%c0_22, %c0_23] : memref<96x32xf32, #tpu.memory_space<vmem>>, vector<96x32xf32>
    %cst_24 = arith.constant dense<0.000000e+00> : vector<32x32xf32>
    %62 = tpu.matmul %60, %61, %cst_24 {dimension_numbers = #tpu.dot_dimension_numbers<[1], [0], [0], [1], [0, 0, 1, 1], [], []>} : vector<32x96xf32>, vector<96x32xf32>, vector<32x32xf32> -> vector<32x32xf32>
    %c0_25 = arith.constant 0 : index
    %c0_26 = arith.constant 0 : index
    %63 = vector.load %arg7[%c0_25, %c0_26] : memref<1x32xf32, #tpu.memory_space<vmem>>, vector<1x32xf32>
    %64 = vector.broadcast %63 : vector<1x32xf32> to vector<32x32xf32>
    %65 = arith.addf %62, %64 : vector<32x32xf32>
    %cst_27 = arith.constant 0.000000e+00 : f32
    %66 = vector.broadcast %cst_27 : f32 to vector<32x32xf32>
    %67 = arith.maximumf %65, %66 : vector<32x32xf32>
    %68 = arith.addf %39, %67 : vector<32x32xf32>
    %69 = vector.shape_cast %68 : vector<32x32xf32> to vector<2x16x32xf32>
    %c0_28 = arith.constant 0 : index
    %c0_29 = arith.constant 0 : index
    %c0_30 = arith.constant 0 : index
    %70 = vector.load %arg8[%c0_28, %c0_29, %c0_30] : memref<2x16x32xf32, #tpu.memory_space<vmem>>, vector<2x16x32xf32>
    tpu.vector_store %arg8[%c0_28, %c0_29, %c0_30], %69 {strides = array<i32>} : memref<2x16x32xf32, #tpu.memory_space<vmem>>, vector<2x16x32xf32>,
    return
  }
  func.func @transform_0(%arg0: i32) -> (i32, i32, i32) {
    %c0_i32 = arith.constant 0 : i32
    %c0_i32_0 = arith.constant 0 : i32
    %c0_i32_1 = arith.constant 0 : i32
    return %arg0, %c0_i32, %c0_i32_0 : i32, i32, i32
  }
  func.func @transform_1(%arg0: i32) -> (i32, i32) {
    %c0_i32 = arith.constant 0 : i32
    %c0_i32_0 = arith.constant 0 : i32
    %c0_i32_1 = arith.constant 0 : i32
    return %c0_i32, %c0_i32_0 : i32, i32
  }
  func.func @transform_2(%arg0: i32) -> (i32, i32) {
    %c0_i32 = arith.constant 0 : i32
    %c0_i32_0 = arith.constant 0 : i32
    %c0_i32_1 = arith.constant 0 : i32
    return %c0_i32, %c0_i32_0 : i32, i32
  }
  func.func @transform_3(%arg0: i32) -> (i32, i32) {
    %c0_i32 = arith.constant 0 : i32
    %c0_i32_0 = arith.constant 0 : i32
    %c0_i32_1 = arith.constant 0 : i32
    return %c0_i32, %c0_i32_0 : i32, i32
  }
  func.func @transform_4(%arg0: i32) -> (i32, i32) {
    %c0_i32 = arith.constant 0 : i32
    %c0_i32_0 = arith.constant 0 : i32
    %c0_i32_1 = arith.constant 0 : i32
    return %c0_i32, %c0_i32_0 : i32, i32
  }
  func.func @transform_5(%arg0: i32) -> (i32, i32) {
    %c0_i32 = arith.constant 0 : i32
    %c0_i32_0 = arith.constant 0 : i32
    %c0_i32_1 = arith.constant 0 : i32
    return %c0_i32, %c0_i32_0 : i32, i32
  }
  func.func @transform_6(%arg0: i32) -> (i32, i32) {
    %c0_i32 = arith.constant 0 : i32
    %c0_i32_0 = arith.constant 0 : i32
    %c0_i32_1 = arith.constant 0 : i32
    return %c0_i32, %c0_i32_0 : i32, i32
  }
  func.func @transform_7(%arg0: i32) -> (i32, i32, i32) {
    %c0_i32 = arith.constant 0 : i32
    %c0_i32_0 = arith.constant 0 : i32
    %c0_i32_1 = arith.constant 0 : i32
    return %arg0, %c0_i32, %c0_i32_0 : i32, i32, i32
  }
}

</mosaic_0001>

<llo_original>
// kernel: tpu_custom_call.1
$region0: #{tpu_custom_call.1}
  #allocation0 [shape = 'u32[]', space=smem, size = 0x4, offset = 0x4, fixed_abs, tag = 'smem constant byte address 0x4 - core index']
  #allocation1 [shape = 'u32[144,128]{1,0:T(1,128)}', space=vmem, size = 0x12000, scoped, tag = 'internal scratch']
  %s0 = inlined_call_operand.vmem [shape: f32[4,16,32], index: 0, kind: input, shape index: {}]
  %s1 = inlined_call_operand.vmem [shape: f32[96,32], index: 1, kind: input, shape index: {}]
  %s2 = inlined_call_operand.vmem [shape: f32[1,32], index: 2, kind: input, shape index: {}]
  %s3 = inlined_call_operand.vmem [shape: f32[96,32], index: 3, kind: input, shape index: {}]
  %s4 = inlined_call_operand.vmem [shape: f32[1,32], index: 4, kind: input, shape index: {}]
  %s5 = inlined_call_operand.vmem [shape: f32[96,32], index: 5, kind: input, shape index: {}]
  %s6 = inlined_call_operand.vmem [shape: f32[1,32], index: 6, kind: input, shape index: {}]
  %s7 = inlined_call_operand.hbm [shape: f32[4,16,32], index: 7, kind: output, shape index: {}]
  %s8 = sld [smem:[#allocation0]]
  $region61: #{tpu_custom_call.1} parent=0
    _
  %s10 = ssub.s32 1, %s8
  %s11 = scalar_select 0, %s10, %s8
  $region1: #{tpu_custom_call.1} parent=0
    #allocation2 [shape = 'u8[32768]{0}', space=vmem, size = 0x8000, scoped, tag = 'output window, operand 0']
    #allocation3 [shape = 's32[2]{0}', space=sflag, size = 0x8, scoped, tag = 'scoped memory for tpu_custom_call.1']
    %12 = vsyncpa [#allocation3], 0
    %s13 = scalar_lea.sflag [#allocation3], 1
    %14 = vsyncpa %s13, 0
    loop: start=0, step=1, limit=4
    $region2: #{tpu_custom_call.1} parent=1 // loop_pre_header
      _
    $region3: #{tpu_custom_call.1} parent=1 // loop_header
      %s16 = sphi 0, %s20
      %p17 = scmp.ge.s32.totalorder %s16, 4
      %s26 = sphi 0, %s28
      %s29 = sphi 0, %s26
      %s30 = sphi 0, %s29
      %s46 = sphi 0, %s30
      %s50 = sphi 0, %s50
      %s52 = sphi 0, %s50
      %s53 = sphi 0, %s52
      %s67 = sphi 0, %s53
      %s71 = sphi 0, %s71
      %s73 = sphi 0, %s71
      %s74 = sphi 0, %s73
      %s88 = sphi 0, %s74
      %s92 = sphi 0, %s92
      %s94 = sphi 0, %s92
      %s95 = sphi 0, %s94
      %s109 = sphi 0, %s95
      %s113 = sphi 0, %s113
      %s115 = sphi 0, %s113
      %s116 = sphi 0, %s115
      %s130 = sphi 0, %s116
      %s134 = sphi 0, %s134
      %s136 = sphi 0, %s134
      %s137 = sphi 0, %s136
      %s151 = sphi 0, %s137
      %s155 = sphi 0, %s155
      %s157 = sphi 0, %s155
      %s158 = sphi 0, %s157
      %s172 = sphi 0, %s158
      %s178 = sphi 0, %s180
      %s181 = sphi 0, %s178
      %s182 = sphi 0, %s181
      %s198 = sphi 0, %s182
    $region4: #{tpu_custom_call.1} parent=1 // loop_header_branch
      %19 = sbr.rel (%p17) target = $region8
    $region5: #{tpu_custom_call.1} parent=1 // loop_body
      %s21 = ssub.s32 %s16, 1
      %s22 = ssub.s32 %s16, 2
      %s23 = sadd.s32 %s16, 1
      %s24 = ssub.s32 %s16, %s23
      %p25 = scmp.eq.s32.totalorder %s24, 0
      %s27 = sadd.s32 %s26, 1
      %s28 = scalar_select %p25, %s26, %s27
      %p31 = pneg %p25
      %p32 = scmp.eq.s32.totalorder %s16, 1
      %p33 = por %p31, %p32
      %p34 = scmp.ne.s32.totalorder %s26, %s29
      %p35 = scmp.eq.s32.totalorder %s16, 0
      %p36 = por %p34, %p35
      %p37 = scmp.ne.s32.totalorder %s26, %s29
      %p38 = scmp.eq.s32.totalorder %s21, 1
      %p39 = por %p37, %p38
      %p40 = scmp.ne.s32.totalorder %s29, %s30
      %p41 = scmp.eq.s32.totalorder %s21, 0
      %p42 = por %p40, %p41
      %p43 = scmp.ne.s32.totalorder %s29, %s30
      %p44 = scmp.eq.s32.totalorder %s22, 1
      %p45 = por %p43, %p44
      %p47 = scmp.ne.s32.totalorder %s30, %s46
      %p48 = scmp.eq.s32.totalorder %s22, 0
      %p49 = por %p47, %p48
      %s51 = sadd.s32 %s50, 1
      %p54 = scmp.eq.s32.totalorder %s16, 1
      %p55 = scmp.ne.s32.totalorder %s50, %s52
      %p56 = scmp.eq.s32.totalorder %s16, 0
      %p57 = por %p55, %p56
      %p58 = scmp.ne.s32.totalorder %s50, %s52
      %p59 = scmp.eq.s32.totalorder %s21, 1
      %p60 = por %p58, %p59
      %p61 = scmp.ne.s32.totalorder %s52, %s53
      %p62 = scmp.eq.s32.totalorder %s21, 0
      %p63 = por %p61, %p62
      %p64 = scmp.ne.s32.totalorder %s52, %s53
      %p65 = scmp.eq.s32.totalorder %s22, 1
      %p66 = por %p64, %p65
      %p68 = scmp.ne.s32.totalorder %s53, %s67
      %p69 = scmp.eq.s32.totalorder %s22, 0
      %p70 = por %p68, %p69
      %s72 = sadd.s32 %s71, 1
      %p75 = scmp.eq.s32.totalorder %s16, 1
      %p76 = scmp.ne.s32.totalorder %s71, %s73
      %p77 = scmp.eq.s32.totalorder %s16, 0
      %p78 = por %p76, %p77
      %p79 = scmp.ne.s32.totalorder %s71, %s73
      %p80 = scmp.eq.s32.totalorder %s21, 1
      %p81 = por %p79, %p80
      %p82 = scmp.ne.s32.totalorder %s73, %s74
      %p83 = scmp.eq.s32.totalorder %s21, 0
      %p84 = por %p82, %p83
      %p85 = scmp.ne.s32.totalorder %s73, %s74
      %p86 = scmp.eq.s32.totalorder %s22, 1
      %p87 = por %p85, %p86
      %p89 = scmp.ne.s32.totalorder %s74, %s88
      %p90 = scmp.eq.s32.totalorder %s22, 0
      %p91 = por %p89, %p90
      %s93 = sadd.s32 %s92, 1
      %p96 = scmp.eq.s32.totalorder %s16, 1
      %p97 = scmp.ne.s32.totalorder %s92, %s94
      %p98 = scmp.eq.s32.totalorder %s16, 0
      %p99 = por %p97, %p98
      %p100 = scmp.ne.s32.totalorder %s92, %s94
      %p101 = scmp.eq.s32.totalorder %s21, 1
      %p102 = por %p100, %p101
      %p103 = scmp.ne.s32.totalorder %s94, %s95
      %p104 = scmp.eq.s32.totalorder %s21, 0
      %p105 = por %p103, %p104
      %p106 = scmp.ne.s32.totalorder %s94, %s95
      %p107 = scmp.eq.s32.totalorder %s22, 1
      %p108 = por %p106, %p107
      %p110 = scmp.ne.s32.totalorder %s95, %s109
      %p111 = scmp.eq.s32.totalorder %s22, 0
      %p112 = por %p110, %p111
      %s114 = sadd.s32 %s113, 1
      %p117 = scmp.eq.s32.totalorder %s16, 1
      %p118 = scmp.ne.s32.totalorder %s113, %s115
      %p119 = scmp.eq.s32.totalorder %s16, 0
      %p120 = por %p118, %p119
      %p121 = scmp.ne.s32.totalorder %s113, %s115
      %p122 = scmp.eq.s32.totalorder %s21, 1
      %p123 = por %p121, %p122
      %p124 = scmp.ne.s32.totalorder %s115, %s116
      %p125 = scmp.eq.s32.totalorder %s21, 0
      %p126 = por %p124, %p125
      %p127 = scmp.ne.s32.totalorder %s115, %s116
      %p128 = scmp.eq.s32.totalorder %s22, 1
      %p129 = por %p127, %p128
      %p131 = scmp.ne.s32.totalorder %s116, %s130
      %p132 = scmp.eq.s32.totalorder %s22, 0
      %p133 = por %p131, %p132
      %s135 = sadd.s32 %s134, 1
      %p138 = scmp.eq.s32.totalorder %s16, 1
      %p139 = scmp.ne.s32.totalorder %s134, %s136
      %p140 = scmp.eq.s32.totalorder %s16, 0
      %p141 = por %p139, %p140
      %p142 = scmp.ne.s32.totalorder %s134, %s136
      %p143 = scmp.eq.s32.totalorder %s21, 1
      %p144 = por %p142, %p143
      %p145 = scmp.ne.s32.totalorder %s136, %s137
      %p146 = scmp.eq.s32.totalorder %s21, 0
      %p147 = por %p145, %p146
      %p148 = scmp.ne.s32.totalorder %s136, %s137
      %p149 = scmp.eq.s32.totalorder %s22, 1
      %p150 = por %p148, %p149
      %p152 = scmp.ne.s32.totalorder %s137, %s151
      %p153 = scmp.eq.s32.totalorder %s22, 0
      %p154 = por %p152, %p153
      %s156 = sadd.s32 %s155, 1
      %p159 = scmp.eq.s32.totalorder %s16, 1
      %p160 = scmp.ne.s32.totalorder %s155, %s157
      %p161 = scmp.eq.s32.totalorder %s16, 0
      %p162 = por %p160, %p161
      %p163 = scmp.ne.s32.totalorder %s155, %s157
      %p164 = scmp.eq.s32.totalorder %s21, 1
      %p165 = por %p163, %p164
      %p166 = scmp.ne.s32.totalorder %s157, %s158
      %p167 = scmp.eq.s32.totalorder %s21, 0
      %p168 = por %p166, %p167
      %p169 = scmp.ne.s32.totalorder %s157, %s158
      %p170 = scmp.eq.s32.totalorder %s22, 1
      %p171 = por %p169, %p170
      %p173 = scmp.ne.s32.totalorder %s158, %s172
      %p174 = scmp.eq.s32.totalorder %s22, 0
      %p175 = por %p173, %p174
      %s176 = ssub.s32 %s16, %s23
      %p177 = scmp.eq.s32.totalorder %s176, 0
      %s179 = sadd.s32 %s178, 1
      %s180 = scalar_select %p177, %s178, %s179
      %p183 = pneg %p177
      %p184 = scmp.eq.s32.totalorder %s16, 1
      %p185 = por %p183, %p184
      %p186 = scmp.ne.s32.totalorder %s178, %s181
      %p187 = scmp.eq.s32.totalorder %s16, 0
      %p188 = por %p186, %p187
      %p189 = scmp.ne.s32.totalorder %s178, %s181
      %p190 = scmp.eq.s32.totalorder %s21, 1
      %p191 = por %p189, %p190
      %p192 = scmp.ne.s32.totalorder %s181, %s182
      %p193 = scmp.eq.s32.totalorder %s21, 0
      %p194 = por %p192, %p193
      %p195 = scmp.ne.s32.totalorder %s181, %s182
      %p196 = scmp.eq.s32.totalorder %s22, 1
      %p197 = por %p195, %p196
      %p199 = scmp.ne.s32.totalorder %s182, %s198
      %p200 = scmp.eq.s32.totalorder %s22, 0
      %p201 = por %p199, %p200
      %p202 = scmp.le.s32.totalorder 1, %s16
      %p203 = scmp.lt.s32.totalorder %s16, 3
      %p204 = pnand %p202, %p203
      %p205 = pneg %p204
      // Predicated region
      $region9: #{tpu_custom_call.1} parent=5 // pred_check
        _
      $region10: #{tpu_custom_call.1} parent=5 // pred_check_branch
        %207 = sbr.rel (%p204) target = $region12
      $region11: #{tpu_custom_call.1} parent=5 // pred_region
        %s208 = ssub.s32 %s16, 1
        // Predicated region
        $region13: #{tpu_custom_call.1} parent=11 // pred_check
          %p209 = pneg %p63
        $region14: #{tpu_custom_call.1} parent=11 // pred_check_branch
          %211 = sbr.rel (%p209) target = $region16
        $region15: #{tpu_custom_call.1} parent=11 // pred_region
          _
        $region16: #{tpu_custom_call.1} parent=11 // pred_fallthru
          _
        // Predicated region
        $region17: #{tpu_custom_call.1} parent=11 // pred_check
          %p212 = pneg %p84
        $region18: #{tpu_custom_call.1} parent=11 // pred_check_branch
          %214 = sbr.rel (%p212) target = $region20
        $region19: #{tpu_custom_call.1} parent=11 // pred_region
          _
        $region20: #{tpu_custom_call.1} parent=11 // pred_fallthru
          _
        // Predicated region
        $region21: #{tpu_custom_call.1} parent=11 // pred_check
          %p215 = pneg %p105
        $region22: #{tpu_custom_call.1} parent=11 // pred_check_branch
          %217 = sbr.rel (%p215) target = $region24
        $region23: #{tpu_custom_call.1} parent=11 // pred_region
          _
        $region24: #{tpu_custom_call.1} parent=11 // pred_fallthru
          _
        // Predicated region
        $region25: #{tpu_custom_call.1} parent=11 // pred_check
          %p218 = pneg %p126
        $region26: #{tpu_custom_call.1} parent=11 // pred_check_branch
          %220 = sbr.rel (%p218) target = $region28
        $region27: #{tpu_custom_call.1} parent=11 // pred_region
          _
        $region28: #{tpu_custom_call.1} parent=11 // pred_fallthru
          _
        // Predicated region
        $region29: #{tpu_custom_call.1} parent=11 // pred_check
          %p221 = pneg %p147
        $region30: #{tpu_custom_call.1} parent=11 // pred_check_branch
          %223 = sbr.rel (%p221) target = $region32
        $region31: #{tpu_custom_call.1} parent=11 // pred_region
          _
        $region32: #{tpu_custom_call.1} parent=11 // pred_fallthru
          _
        // Predicated region
        $region33: #{tpu_custom_call.1} parent=11 // pred_check
          %p224 = pneg %p168
        $region34: #{tpu_custom_call.1} parent=11 // pred_check_branch
          %226 = sbr.rel (%p224) target = $region36
        $region35: #{tpu_custom_call.1} parent=11 // pred_region
          _
        $region36: #{tpu_custom_call.1} parent=11 // pred_fallthru
          _
      $region12: #{tpu_custom_call.1} parent=5 // pred_fallthru
        _
      %p227 = scmp.lt.s32.totalorder %s16, 2
      // Predicated region
      $region37: #{tpu_custom_call.1} parent=5 // pred_check
        %p228 = pneg %p227
      $region38: #{tpu_custom_call.1} parent=5 // pred_check_branch
        %230 = sbr.rel (%p228) target = $region40
      $region39: #{tpu_custom_call.1} parent=5 // pred_region
        // Predicated region
        $region41: #{tpu_custom_call.1} parent=39 // pred_check
          %p231 = pneg %p36
        $region42: #{tpu_custom_call.1} parent=39 // pred_check_branch
          %233 = sbr.rel (%p231) target = $region44
        $region43: #{tpu_custom_call.1} parent=39 // pred_region
          %s234 = smul.u32 2, %s16
          %p235 = scmp.lt.s32.totalorder %s234, 3
          %s236 = scalar_select %p235, %s234, 3
          %s237 = smul.addr %s236, 2
          %s238 = smul.addr %s237, 8
          %s239 = scalar_lea.vmem %s0, %s238
          %s240 = smul.u32 2, %s16
        $region44: #{tpu_custom_call.1} parent=39 // pred_fallthru
          _
      $region40: #{tpu_custom_call.1} parent=5 // pred_fallthru
        _
      %p241 = scmp.le.s32.totalorder 1, %s16
      %p242 = scmp.lt.s32.totalorder %s16, 3
      %p243 = pnand %p241, %p242
      %p244 = pneg %p243
      // Predicated region
      $region45: #{tpu_custom_call.1} parent=5 // pred_check
        _
      $region46: #{tpu_custom_call.1} parent=5 // pred_check_branch
        %246 = sbr.rel (%p243) target = $region48
      $region47: #{tpu_custom_call.1} parent=5 // pred_region
        %s247 = ssub.s32 %s16, 1
        %s248 = smul.u32 2, %s21
        %p249 = scmp.lt.s32.totalorder %s248, 3
        %s250 = scalar_select %p249, %s248, 3
        %s251 = smul.addr %s250, 2
        %s252 = smul.addr %s251, 8
        %s253 = scalar_lea.vmem %s0, %s252
        %p254 = pneg %p42
        %p255 = pneg %p39
        %p256 = pneg %p63
        %p257 = pneg %p60
        %p258 = pneg %p84
        %p259 = pneg %p81
        %p260 = pneg %p105
        %p261 = pneg %p102
        %p262 = pneg %p126
        %p263 = pneg %p123
        %p264 = pneg %p147
        %p265 = pneg %p144
        %p266 = pneg %p168
        %p267 = pneg %p165
        %p268 = pneg %p194
        %p269 = pneg %p191
        %s270 = sand.u32 %s181, 1
        %s271 = scalar_lea.sflag [#allocation3], %s270
        %s272 = sand.u32 %s181, 1
        %s273 = smul.addr %s272, 32
        %s274 = scalar_lea.vmem [#allocation2], %s273
        %s275 = smul.u32 2, %s21
        %p276 = scmp.lt.s32.totalorder %s275, 3
        %s277 = scalar_select %p276, %s275, 3
        %s278 = smul.addr %s277, 2
        %s279 = smul.addr %s278, 8
        %s280 = scalar_lea.vmem %s0, %s279
        %s281 = smul.u32 2, %s21
        %s282 = smul.u32 2, %s21
        %v283 = vld [vmem:[%s280] sm:$0xff]
        %v284 = vld [vmem:[%s280 + $0x8] sm:$0xff]
        %v285 = vld [vmem:[%s280 + $0x10] sm:$0xff]
        %v286 = vld [vmem:[%s280 + $0x18] sm:$0xff]
        %v287 = vlaneseq
        %v288 = vshrl.u32 %v287, 7
        %v289 = vadd.s32 %v288, 8
        %v290 = vadd.s32 %v288, 4294967295
        %v291 = vadd.s32 %v289, 4294967295
        %vm292 = vcmp.ge.s32.totalorder %v290, 0
        %vm293 = vcmp.ge.s32.totalorder %v291, 0
        %vm294 = vcmp.lt.s32.totalorder %v290, 16
        %vm295 = vcmp.lt.s32.totalorder %v291, 16
        %vm296 = vmand %vm292, %vm294
        %vm297 = vmand %vm293, %vm295
        %v298 = vsel %vm296, 1, 0
        %v299 = vsel %vm297, 1, 0
        %v300 = vcvt.s32.f32 %v298
        %v301 = vcvt.s32.f32 %v299
        %v302 = vadd.s32 %v288, 1
        %v303 = vadd.s32 %v289, 1
        %vm304 = vcmp.ge.s32.totalorder %v302, 0
        %vm305 = vcmp.ge.s32.totalorder %v303, 0
        %vm306 = vcmp.lt.s32.totalorder %v302, 16
        %vm307 = vcmp.lt.s32.totalorder %v303, 16
        %vm308 = vmand %vm304, %vm306
        %vm309 = vmand %vm305, %vm307
        %v310 = vsel %vm308, 1, 0
        %v311 = vsel %vm309, 1, 0
        %v312 = vcvt.s32.f32 %v310
        %v313 = vcvt.s32.f32 %v311
        %v314 = vrot.slane %v283, 7
        %v315 = vrot.slane %v284, 7
        %v316 = vrot.slane %v285, 7
        %v317 = vrot.slane %v286, 7
        %vm318 = vcmp.lt.s32.totalorder %v288, 1
        %v319 = vsel %vm318, %v316, %v317
        %v320 = vsel %vm318, %v315, %v316
        %v321 = vsel %vm318, %v314, %v315
        %v322 = vsel %vm318, %v317, %v314
        %v323 = vmul.f32 %v322, %v300
        %v324 = vmul.f32 %v321, %v301
        %v325 = vmul.f32 %v320, %v300
        %v326 = vmul.f32 %v319, %v301
        %v327 = vrot.slane %v283, 1
        %v328 = vrot.slane %v284, 1
        %v329 = vrot.slane %v285, 1
        %v330 = vrot.slane %v286, 1
        %vm331 = vcmp.lt.s32.totalorder %v288, 7
        %v332 = vsel %vm331, %v329, %v330
        %v333 = vsel %vm331, %v328, %v329
        %v334 = vsel %vm331, %v327, %v328
        %v335 = vsel %vm331, %v330, %v327
        %v336 = vmul.f32 %v334, %v312
        %v337 = vmul.f32 %v333, %v313
        %v338 = vmul.f32 %v332, %v312
        %v339 = vmul.f32 %v335, %v313
        %344 = vrot.lane.b32.xlu0 %v283, 32
        %v345 = vpop.permute.xlu0 %344
        %346 = vrot.lane.b32.xlu0 %v284, 32
        %v347 = vpop.permute.xlu0 %346
        %348 = vrot.lane.b32.xlu0 %v285, 32
        %v349 = vpop.permute.xlu0 %348
        %350 = vrot.lane.b32.xlu0 %v286, 32
        %v351 = vpop.permute.xlu0 %350
        %360 = vrot.lane.b32.xlu0 %v336, 64
        %v361 = vpop.permute.xlu0 %360
        %362 = vrot.lane.b32.xlu0 %v337, 64
        %v363 = vpop.permute.xlu0 %362
        %364 = vrot.lane.b32.xlu0 %v338, 64
        %v365 = vpop.permute.xlu0 %364
        %366 = vrot.lane.b32.xlu0 %v339, 64
        %v367 = vpop.permute.xlu0 %366
        %vm372 = vcmask 261120
        %v373 = vsel %vm372, %v323, %v345
        %v374 = vsel %vm372, %v324, %v347
        %v375 = vsel %vm372, %v325, %v349
        %v376 = vsel %vm372, %v326, %v351
        %vm377 = vcmask 523264
        %v378 = vsel %vm377, %v373, %v361
        %v379 = vsel %vm377, %v374, %v363
        %v380 = vsel %vm377, %v375, %v365
        %v381 = vsel %vm377, %v376, %v367
        %v382 = vld [vmem:[%s1] sm:$0xff]
        %v383 = vld [vmem:[%s1 + $0x8] sm:$0xff]
        %v384 = vld [vmem:[%s1 + $0x10] sm:$0xff]
        %v385 = vld [vmem:[%s1 + $0x18] sm:$0xff]
        %v386 = vld [vmem:[%s1 + $0x20] sm:$0xff]
        %v387 = vld [vmem:[%s1 + $0x28] sm:$0xff]
        %v388 = vld [vmem:[%s1 + $0x30] sm:$0xff]
        %v389 = vld [vmem:[%s1 + $0x38] sm:$0xff]
        %v390 = vld [vmem:[%s1 + $0x40] sm:$0xff]
        %v391 = vld [vmem:[%s1 + $0x48] sm:$0xff]
        %v392 = vld [vmem:[%s1 + $0x50] sm:$0xff]
        %v393 = vld [vmem:[%s1 + $0x58] sm:$0xff]
        %v394 = vld [vmem:[%s2] sm:$0x1]
        %v396 = vlaneseq
        %v397 = vshrl.u32 %v396, 7
        %v398 = vsub.s32 0, %v397
        %v399 = vrot.slane %v394, %v398
        %vm401 = vcmask 785408
        %v403 = vsel %vm401, %v378, 0
        %v406 = vsel %vm401, %v379, 0
        %v409 = vsel %vm401, %v380, 0
        %v412 = vsel %vm401, %v381, 0
        %414 = vmatprep.subr.mxu0 0.0
        %415 = vmatpush1.msra.mxu0 %v382
        %416 = vmatprep.subr.mxu0 0.0
        %417 = vmatpush1.msra.mxu0 %v383
        %418 = vmatprep.subr.mxu0 0.0
        %419 = vmatpush1.msra.mxu0 %v384
        %420 = vmatprep.subr.mxu0 0.0
        %421 = vmatpush1.msra.mxu0 %v385
        %422 = vmatprep.subr.mxu0 0.0
        %423 = vmatpush1.msra.mxu0 %v386
        %424 = vmatprep.subr.mxu0 0.0
        %425 = vmatpush1.msra.mxu0 %v387
        %426 = vmatprep.subr.mxu0 0.0
        %427 = vmatpush1.msra.mxu0 %v388
        %428 = vmatprep.subr.mxu0 0.0
        %429 = vmatpush1.msra.mxu0 %v389
        %430 = vmatprep.subr.mxu0 0.0
        %431 = vmatpush1.msra.mxu0 %v390
        %432 = vmatprep.subr.mxu0 0.0
        %433 = vmatpush1.msra.mxu0 %v391
        %434 = vmatprep.subr.mxu0 0.0
        %435 = vmatpush1.msra.mxu0 %v392
        %436 = vmatprep.subr.mxu0 0.0
        %437 = vmatpush1.msra.mxu0 %v393
        %438 = vmatprep.subr.mxu0 0.0
        %439 = vmatpush1.msra.mxu0 0.0
        %440 = vmatprep.subr.mxu0 0.0
        %441 = vmatpush1.msra.mxu0 0.0
        %442 = vmatprep.subr.mxu0 0.0
        %443 = vmatpush1.msra.mxu0 0.0
        %444 = vmatprep.subr.mxu0 0.0
        %445 = vmatpush1.msra.mxu0 0.0
        %446 = vmatprep.subr.mxu0 0.0
        %447 = vmatpush1.msra.mxu0 0.0
        %448 = vmatprep.subr.mxu0 0.0
        %449 = vmatpush1.msra.mxu0 0.0
        %450 = vmatprep.subr.mxu0 0.0
        %451 = vmatpush1.msra.mxu0 0.0
        %452 = vmatprep.subr.mxu0 0.0
        %453 = vmatpush1.msra.mxu0 0.0
        %454 = vmatprep.subr.mxu0 0.0
        %455 = vmatpush1.msra.mxu0 0.0
        %456 = vmatprep.subr.mxu0 0.0
        %457 = vmatpush1.msra.mxu0 0.0
        %458 = vmatprep.subr.mxu0 0.0
        %459 = vmatpush1.msra.mxu0 0.0
        %460 = vmatprep.subr.mxu0 0.0
        %461 = vmatpush1.msra.mxu0 0.0
        %462 = vmatprep.subr.mxu0 0.0
        %463 = vmatpush1.msra.mxu0 0.0
        %464 = vmatprep.subr.mxu0 0.0
        %465 = vmatpush1.msra.mxu0 0.0
        %466 = vmatprep.subr.mxu0 0.0
        %467 = vmatpush1.msra.mxu0 0.0
        %468 = vmatprep.subr.mxu0 0.0
        %469 = vmatpush1.msra.mxu0 0.0
        %470 = vmatprep.subr.mxu0 0.0
        %471 = vmatpush1.msra.mxu0 0.0
        %472 = vmatprep.subr.mxu0 0.0
        %473 = vmatpush1.msra.mxu0 0.0
        %474 = vmatprep.subr.mxu0 0.0
        %475 = vmatpush1.msra.mxu0 0.0
        %476 = vmatprep.subr.mxu0 0.0
        %477 = vmatpush1.msra.mxu0 0.0
        %478 = vmatprep.mubr.f32.mxu0 0.0
        %479 = vmatmul.mubr.f32.gmra.mrb[0].mxu0 %v403
        %v480 = vpop.f32.mrb[0].mxu0
        %v481 = vadd.f32 %v399, %v480
        %v482 = vpop.f32.mrb[0].mxu0
        %483 = vmatprep.mubr.f32.mxu0 0.0
        %484 = vmatmul.mubr.f32.gmra.mrb[0].mxu0 %v406
        %v485 = vpop.f32.mrb[0].mxu0
        %v486 = vadd.f32 %v399, %v485
        %v487 = vpop.f32.mrb[0].mxu0
        %488 = vmatprep.mubr.f32.mxu0 0.0
        %489 = vmatmul.mubr.f32.gmra.mrb[0].mxu0 %v409
        %v490 = vpop.f32.mrb[0].mxu0
        %v491 = vadd.f32 %v399, %v490
        %v492 = vpop.f32.mrb[0].mxu0
        %493 = vmatprep.mubr.f32.mxu0 0.0
        %494 = vmatmul.mubr.f32.gmra.mrb[0].mxu0 %v412
        %v495 = vpop.f32.mrb[0].mxu0
        %v496 = vadd.f32 %v399, %v495
        %v497 = vpop.f32.mrb[0].mxu0
        %498 = vdwg.mxu0
        %v499 = vmax.f32 %v481, 0.0
        %v500 = vmax.f32 %v486, 0.0
        %v501 = vmax.f32 %v491, 0.0
        %v502 = vmax.f32 %v496, 0.0
        %v503 = vrot.slane %v499, 7
        %v504 = vrot.slane %v500, 7
        %v505 = vrot.slane %v501, 7
        %v506 = vrot.slane %v502, 7
        %v507 = vsel %vm318, %v505, %v506
        %v508 = vsel %vm318, %v504, %v505
        %v509 = vsel %vm318, %v503, %v504
        %v510 = vsel %vm318, %v506, %v503
        %v511 = vmul.f32 %v510, %v300
        %v512 = vmul.f32 %v509, %v301
        %v513 = vmul.f32 %v508, %v300
        %v514 = vmul.f32 %v507, %v301
        %v515 = vrot.slane %v499, 1
        %v516 = vrot.slane %v500, 1
        %v517 = vrot.slane %v501, 1
        %v518 = vrot.slane %v502, 1
        %v519 = vsel %vm331, %v517, %v518
        %v520 = vsel %vm331, %v516, %v517
        %v521 = vsel %vm331, %v515, %v516
        %v522 = vsel %vm331, %v518, %v515
        %v523 = vmul.f32 %v521, %v312
        %v524 = vmul.f32 %v520, %v313
        %v525 = vmul.f32 %v519, %v312
        %v526 = vmul.f32 %v522, %v313
        %531 = vrot.lane.b32.xlu0 %v499, 32
        %v532 = vpop.permute.xlu0 %531
        %533 = vrot.lane.b32.xlu0 %v500, 32
        %v534 = vpop.permute.xlu0 %533
        %535 = vrot.lane.b32.xlu0 %v501, 32
        %v536 = vpop.permute.xlu0 %535
        %537 = vrot.lane.b32.xlu0 %v502, 32
        %v538 = vpop.permute.xlu0 %537
        %547 = vrot.lane.b32.xlu0 %v523, 64
        %v548 = vpop.permute.xlu0 %547
        %549 = vrot.lane.b32.xlu0 %v524, 64
        %v550 = vpop.permute.xlu0 %549
        %551 = vrot.lane.b32.xlu0 %v525, 64
        %v552 = vpop.permute.xlu0 %551
        %553 = vrot.lane.b32.xlu0 %v526, 64
        %v554 = vpop.permute.xlu0 %553
        %v559 = vsel %vm372, %v511, %v532
        %v560 = vsel %vm372, %v512, %v534
        %v561 = vsel %vm372, %v513, %v536
        %v562 = vsel %vm372, %v514, %v538
        %v563 = vsel %vm377, %v559, %v548
        %v564 = vsel %vm377, %v560, %v550
        %v565 = vsel %vm377, %v561, %v552
        %v566 = vsel %vm377, %v562, %v554
        %v567 = vld [vmem:[%s3] sm:$0xff]
        %v568 = vld [vmem:[%s3 + $0x8] sm:$0xff]
        %v569 = vld [vmem:[%s3 + $0x10] sm:$0xff]
        %v570 = vld [vmem:[%s3 + $0x18] sm:$0xff]
        %v571 = vld [vmem:[%s3 + $0x20] sm:$0xff]
        %v572 = vld [vmem:[%s3 + $0x28] sm:$0xff]
        %v573 = vld [vmem:[%s3 + $0x30] sm:$0xff]
        %v574 = vld [vmem:[%s3 + $0x38] sm:$0xff]
        %v575 = vld [vmem:[%s3 + $0x40] sm:$0xff]
        %v576 = vld [vmem:[%s3 + $0x48] sm:$0xff]
        %v577 = vld [vmem:[%s3 + $0x50] sm:$0xff]
        %v578 = vld [vmem:[%s3 + $0x58] sm:$0xff]
        %v579 = vld [vmem:[%s4] sm:$0x1]
        %v581 = vlaneseq
        %v582 = vshrl.u32 %v581, 7
        %v583 = vsub.s32 0, %v582
        %v584 = vrot.slane %v579, %v583
        %v587 = vsel %vm401, %v563, 0
        %v590 = vsel %vm401, %v564, 0
        %v593 = vsel %vm401, %v565, 0
        %v596 = vsel %vm401, %v566, 0
        %598 = vmatprep.subr.mxu0 0.0
        %599 = vmatpush1.msra.mxu0 %v567
        %600 = vmatprep.subr.mxu0 0.0
        %601 = vmatpush1.msra.mxu0 %v568
        %602 = vmatprep.subr.mxu0 0.0
        %603 = vmatpush1.msra.mxu0 %v569
        %604 = vmatprep.subr.mxu0 0.0
        %605 = vmatpush1.msra.mxu0 %v570
        %606 = vmatprep.subr.mxu0 0.0
        %607 = vmatpush1.msra.mxu0 %v571
        %608 = vmatprep.subr.mxu0 0.0
        %609 = vmatpush1.msra.mxu0 %v572
        %610 = vmatprep.subr.mxu0 0.0
        %611 = vmatpush1.msra.mxu0 %v573
        %612 = vmatprep.subr.mxu0 0.0
        %613 = vmatpush1.msra.mxu0 %v574
        %614 = vmatprep.subr.mxu0 0.0
        %615 = vmatpush1.msra.mxu0 %v575
        %616 = vmatprep.subr.mxu0 0.0
        %617 = vmatpush1.msra.mxu0 %v576
        %618 = vmatprep.subr.mxu0 0.0
        %619 = vmatpush1.msra.mxu0 %v577
        %620 = vmatprep.subr.mxu0 0.0
        %621 = vmatpush1.msra.mxu0 %v578
        %622 = vmatprep.subr.mxu0 0.0
        %623 = vmatpush1.msra.mxu0 0.0
        %624 = vmatprep.subr.mxu0 0.0
        %625 = vmatpush1.msra.mxu0 0.0
        %626 = vmatprep.subr.mxu0 0.0
        %627 = vmatpush1.msra.mxu0 0.0
        %628 = vmatprep.subr.mxu0 0.0
        %629 = vmatpush1.msra.mxu0 0.0
        %630 = vmatprep.subr.mxu0 0.0
        %631 = vmatpush1.msra.mxu0 0.0
        %632 = vmatprep.subr.mxu0 0.0
        %633 = vmatpush1.msra.mxu0 0.0
        %634 = vmatprep.subr.mxu0 0.0
        %635 = vmatpush1.msra.mxu0 0.0
        %636 = vmatprep.subr.mxu0 0.0
        %637 = vmatpush1.msra.mxu0 0.0
        %638 = vmatprep.subr.mxu0 0.0
        %639 = vmatpush1.msra.mxu0 0.0
        %640 = vmatprep.subr.mxu0 0.0
        %641 = vmatpush1.msra.mxu0 0.0
        %642 = vmatprep.subr.mxu0 0.0
        %643 = vmatpush1.msra.mxu0 0.0
        %644 = vmatprep.subr.mxu0 0.0
        %645 = vmatpush1.msra.mxu0 0.0
        %646 = vmatprep.subr.mxu0 0.0
        %647 = vmatpush1.msra.mxu0 0.0
        %648 = vmatprep.subr.mxu0 0.0
        %649 = vmatpush1.msra.mxu0 0.0
        %650 = vmatprep.subr.mxu0 0.0
        %651 = vmatpush1.msra.mxu0 0.0
        %652 = vmatprep.subr.mxu0 0.0
        %653 = vmatpush1.msra.mxu0 0.0
        %654 = vmatprep.subr.mxu0 0.0
        %655 = vmatpush1.msra.mxu0 0.0
        %656 = vmatprep.subr.mxu0 0.0
        %657 = vmatpush1.msra.mxu0 0.0
        %658 = vmatprep.subr.mxu0 0.0
        %659 = vmatpush1.msra.mxu0 0.0
        %660 = vmatprep.subr.mxu0 0.0
        %661 = vmatpush1.msra.mxu0 0.0
        %662 = vmatprep.mubr.f32.mxu0 0.0
        %663 = vmatmul.mubr.f32.gmra.mrb[0].mxu0 %v587
        %v664 = vpop.f32.mrb[0].mxu0
        %v665 = vadd.f32 %v584, %v664
        %v666 = vpop.f32.mrb[0].mxu0
        %667 = vmatprep.mubr.f32.mxu0 0.0
        %668 = vmatmul.mubr.f32.gmra.mrb[0].mxu0 %v590
        %v669 = vpop.f32.mrb[0].mxu0
        %v670 = vadd.f32 %v584, %v669
        %v671 = vpop.f32.mrb[0].mxu0
        %672 = vmatprep.mubr.f32.mxu0 0.0
        %673 = vmatmul.mubr.f32.gmra.mrb[0].mxu0 %v593
        %v674 = vpop.f32.mrb[0].mxu0
        %v675 = vadd.f32 %v584, %v674
        %v676 = vpop.f32.mrb[0].mxu0
        %677 = vmatprep.mubr.f32.mxu0 0.0
        %678 = vmatmul.mubr.f32.gmra.mrb[0].mxu0 %v596
        %v679 = vpop.f32.mrb[0].mxu0
        %v680 = vadd.f32 %v584, %v679
        %v681 = vpop.f32.mrb[0].mxu0
        %682 = vdwg.mxu0
        %v683 = vmax.f32 %v665, 0.0
        %v684 = vmax.f32 %v670, 0.0
        %v685 = vmax.f32 %v675, 0.0
        %v686 = vmax.f32 %v680, 0.0
        %v687 = vrot.slane %v683, 7
        %v688 = vrot.slane %v684, 7
        %v689 = vrot.slane %v685, 7
        %v690 = vrot.slane %v686, 7
        %v691 = vsel %vm318, %v689, %v690
        %v692 = vsel %vm318, %v688, %v689
        %v693 = vsel %vm318, %v687, %v688
        %v694 = vsel %vm318, %v690, %v687
        %v695 = vmul.f32 %v694, %v300
        %v696 = vmul.f32 %v693, %v301
        %v697 = vmul.f32 %v692, %v300
        %v698 = vmul.f32 %v691, %v301
        %v699 = vrot.slane %v683, 1
        %v700 = vrot.slane %v684, 1
        %v701 = vrot.slane %v685, 1
        %v702 = vrot.slane %v686, 1
        %v703 = vsel %vm331, %v701, %v702
        %v704 = vsel %vm331, %v700, %v701
        %v705 = vsel %vm331, %v699, %v700
        %v706 = vsel %vm331, %v702, %v699
        %v707 = vmul.f32 %v705, %v312
        %v708 = vmul.f32 %v704, %v313
        %v709 = vmul.f32 %v703, %v312
        %v710 = vmul.f32 %v706, %v313
        %715 = vrot.lane.b32.xlu0 %v683, 32
        %v716 = vpop.permute.xlu0 %715
        %717 = vrot.lane.b32.xlu0 %v684, 32
        %v718 = vpop.permute.xlu0 %717
        %719 = vrot.lane.b32.xlu0 %v685, 32
        %v720 = vpop.permute.xlu0 %719
        %721 = vrot.lane.b32.xlu0 %v686, 32
        %v722 = vpop.permute.xlu0 %721
        %731 = vrot.lane.b32.xlu0 %v707, 64
        %v732 = vpop.permute.xlu0 %731
        %733 = vrot.lane.b32.xlu0 %v708, 64
        %v734 = vpop.permute.xlu0 %733
        %735 = vrot.lane.b32.xlu0 %v709, 64
        %v736 = vpop.permute.xlu0 %735
        %737 = vrot.lane.b32.xlu0 %v710, 64
        %v738 = vpop.permute.xlu0 %737
        %v743 = vsel %vm372, %v695, %v716
        %v744 = vsel %vm372, %v696, %v718
        %v745 = vsel %vm372, %v697, %v720
        %v746 = vsel %vm372, %v698, %v722
        %v747 = vsel %vm377, %v743, %v732
        %v748 = vsel %vm377, %v744, %v734
        %v749 = vsel %vm377, %v745, %v736
        %v750 = vsel %vm377, %v746, %v738
        %v751 = vld [vmem:[%s5] sm:$0xff]
        %v752 = vld [vmem:[%s5 + $0x8] sm:$0xff]
        %v753 = vld [vmem:[%s5 + $0x10] sm:$0xff]
        %v754 = vld [vmem:[%s5 + $0x18] sm:$0xff]
        %v755 = vld [vmem:[%s5 + $0x20] sm:$0xff]
        %v756 = vld [vmem:[%s5 + $0x28] sm:$0xff]
        %v757 = vld [vmem:[%s5 + $0x30] sm:$0xff]
        %v758 = vld [vmem:[%s5 + $0x38] sm:$0xff]
        %v759 = vld [vmem:[%s5 + $0x40] sm:$0xff]
        %v760 = vld [vmem:[%s5 + $0x48] sm:$0xff]
        %v761 = vld [vmem:[%s5 + $0x50] sm:$0xff]
        %v762 = vld [vmem:[%s5 + $0x58] sm:$0xff]
        %v763 = vld [vmem:[%s6] sm:$0x1]
        %v765 = vlaneseq
        %v766 = vshrl.u32 %v765, 7
        %v767 = vsub.s32 0, %v766
        %v768 = vrot.slane %v763, %v767
        %v771 = vsel %vm401, %v747, 0
        %v774 = vsel %vm401, %v748, 0
        %v777 = vsel %vm401, %v749, 0
        %v780 = vsel %vm401, %v750, 0
        %782 = vmatprep.subr.mxu0 0.0
        %783 = vmatpush1.msra.mxu0 %v751
        %784 = vmatprep.subr.mxu0 0.0
        %785 = vmatpush1.msra.mxu0 %v752
        %786 = vmatprep.subr.mxu0 0.0
        %787 = vmatpush1.msra.mxu0 %v753
        %788 = vmatprep.subr.mxu0 0.0
        %789 = vmatpush1.msra.mxu0 %v754
        %790 = vmatprep.subr.mxu0 0.0
        %791 = vmatpush1.msra.mxu0 %v755
        %792 = vmatprep.subr.mxu0 0.0
        %793 = vmatpush1.msra.mxu0 %v756
        %794 = vmatprep.subr.mxu0 0.0
        %795 = vmatpush1.msra.mxu0 %v757
        %796 = vmatprep.subr.mxu0 0.0
        %797 = vmatpush1.msra.mxu0 %v758
        %798 = vmatprep.subr.mxu0 0.0
        %799 = vmatpush1.msra.mxu0 %v759
        %800 = vmatprep.subr.mxu0 0.0
        %801 = vmatpush1.msra.mxu0 %v760
        %802 = vmatprep.subr.mxu0 0.0
        %803 = vmatpush1.msra.mxu0 %v761
        %804 = vmatprep.subr.mxu0 0.0
        %805 = vmatpush1.msra.mxu0 %v762
        %806 = vmatprep.subr.mxu0 0.0
        %807 = vmatpush1.msra.mxu0 0.0
        %808 = vmatprep.subr.mxu0 0.0
        %809 = vmatpush1.msra.mxu0 0.0
        %810 = vmatprep.subr.mxu0 0.0
        %811 = vmatpush1.msra.mxu0 0.0
        %812 = vmatprep.subr.mxu0 0.0
        %813 = vmatpush1.msra.mxu0 0.0
        %814 = vmatprep.subr.mxu0 0.0
        %815 = vmatpush1.msra.mxu0 0.0
        %816 = vmatprep.subr.mxu0 0.0
        %817 = vmatpush1.msra.mxu0 0.0
        %818 = vmatprep.subr.mxu0 0.0
        %819 = vmatpush1.msra.mxu0 0.0
        %820 = vmatprep.subr.mxu0 0.0
        %821 = vmatpush1.msra.mxu0 0.0
        %822 = vmatprep.subr.mxu0 0.0
        %823 = vmatpush1.msra.mxu0 0.0
        %824 = vmatprep.subr.mxu0 0.0
        %825 = vmatpush1.msra.mxu0 0.0
        %826 = vmatprep.subr.mxu0 0.0
        %827 = vmatpush1.msra.mxu0 0.0
        %828 = vmatprep.subr.mxu0 0.0
        %829 = vmatpush1.msra.mxu0 0.0
        %830 = vmatprep.subr.mxu0 0.0
        %831 = vmatpush1.msra.mxu0 0.0
        %832 = vmatprep.subr.mxu0 0.0
        %833 = vmatpush1.msra.mxu0 0.0
        %834 = vmatprep.subr.mxu0 0.0
        %835 = vmatpush1.msra.mxu0 0.0
        %836 = vmatprep.subr.mxu0 0.0
        %837 = vmatpush1.msra.mxu0 0.0
        %838 = vmatprep.subr.mxu0 0.0
        %839 = vmatpush1.msra.mxu0 0.0
        %840 = vmatprep.subr.mxu0 0.0
        %841 = vmatpush1.msra.mxu0 0.0
        %842 = vmatprep.subr.mxu0 0.0
        %843 = vmatpush1.msra.mxu0 0.0
        %844 = vmatprep.subr.mxu0 0.0
        %845 = vmatpush1.msra.mxu0 0.0
        %846 = vmatprep.mubr.f32.mxu0 0.0
        %847 = vmatmul.mubr.f32.gmra.mrb[0].mxu0 %v771
        %v848 = vpop.f32.mrb[0].mxu0
        %v849 = vadd.f32 %v768, %v848
        %v850 = vpop.f32.mrb[0].mxu0
        %851 = vmatprep.mubr.f32.mxu0 0.0
        %852 = vmatmul.mubr.f32.gmra.mrb[0].mxu0 %v774
        %v853 = vpop.f32.mrb[0].mxu0
        %v854 = vadd.f32 %v768, %v853
        %v855 = vpop.f32.mrb[0].mxu0
        %856 = vmatprep.mubr.f32.mxu0 0.0
        %857 = vmatmul.mubr.f32.gmra.mrb[0].mxu0 %v777
        %v858 = vpop.f32.mrb[0].mxu0
        %v859 = vadd.f32 %v768, %v858
        %v860 = vpop.f32.mrb[0].mxu0
        %861 = vmatprep.mubr.f32.mxu0 0.0
        %862 = vmatmul.mubr.f32.gmra.mrb[0].mxu0 %v780
        %v863 = vpop.f32.mrb[0].mxu0
        %v864 = vadd.f32 %v768, %v863
        %v865 = vpop.f32.mrb[0].mxu0
        %866 = vdwg.mxu0
        %v867 = vmax.f32 %v849, 0.0
        %v868 = vmax.f32 %v854, 0.0
        %v869 = vmax.f32 %v859, 0.0
        %v870 = vmax.f32 %v864, 0.0
        %v871 = vadd.f32 %v499, %v867
        %v872 = vadd.f32 %v500, %v868
        %v873 = vadd.f32 %v501, %v869
        %v874 = vadd.f32 %v502, %v870
        %875 = vst.msk [vmem:[%s274] sm:$0xff] %vm372, %v871
        %876 = vst.msk [vmem:[%s274 + $0x8] sm:$0xff] %vm372, %v872
        %877 = vst.msk [vmem:[%s274 + $0x10] sm:$0xff] %vm372, %v873
        %878 = vst.msk [vmem:[%s274 + $0x18] sm:$0xff] %vm372, %v874
        %s879 = sand.u32 %s181, 1
        %s880 = scalar_lea.sflag [#allocation3], %s879
        %s881 = sand.u32 %s181, 1
        %s882 = smul.addr %s881, 32
        %s883 = scalar_lea.vmem [#allocation2], %s882
        // Predicated region
        $region49: #{tpu_custom_call.1} parent=47 // pred_check
          %p884 = pneg %p191
        $region50: #{tpu_custom_call.1} parent=47 // pred_check_branch
          %886 = sbr.rel (%p884) target = $region52
        $region51: #{tpu_custom_call.1} parent=47 // pred_region
          %s887 = smul.u32 2, %s21
          %s889 = ssub.s32 512, 512
          %890 = vsyncadd %s880, %s889
          %s891 = smul.addr %s887, 2
          %s892 = smul.addr %s891, 128
          %s893 = scalar_lea.hbm %s7, %s892
          %s894 = sshll.u32 %s883, 4
          %s895 = int_to_ptr.vmem [resolvable:$true] %s894
          %900 = dma.vmem_to_hbm [thread:$0]  %s895, 512, %s893, %s880, 128, 128, 8
        $region52: #{tpu_custom_call.1} parent=47 // pred_fallthru
          _
      $region48: #{tpu_custom_call.1} parent=5 // pred_fallthru
        _
      %p901 = scmp.le.s32.totalorder 2, %s16
      // Predicated region
      $region53: #{tpu_custom_call.1} parent=5 // pred_check
        %p902 = pneg %p901
      $region54: #{tpu_custom_call.1} parent=5 // pred_check_branch
        %904 = sbr.rel (%p902) target = $region56
      $region55: #{tpu_custom_call.1} parent=5 // pred_region
        %s905 = ssub.s32 %s16, 2
        // Predicated region
        $region57: #{tpu_custom_call.1} parent=55 // pred_check
          %p906 = pneg %p197
        $region58: #{tpu_custom_call.1} parent=55 // pred_check_branch
          %908 = sbr.rel (%p906) target = $region60
        $region59: #{tpu_custom_call.1} parent=55 // pred_region
          %s909 = sand.u32 %s182, 1
          %s910 = scalar_lea.sflag [#allocation3], %s909
          %s911 = sand.u32 %s182, 1
          %s912 = smul.addr %s911, 32
          %s913 = scalar_lea.vmem [#allocation2], %s912
          %914 = dma.done %s910, 512
        $region60: #{tpu_custom_call.1} parent=55 // pred_fallthru
          _
      $region56: #{tpu_custom_call.1} parent=5 // pred_fallthru
        _
    $region6: #{tpu_custom_call.1} parent=1 // loop_footer
      %s20 = sadd.s32 1, %s16
    $region7: #{tpu_custom_call.1} parent=1 // loop_footer_branch
      %15 = sbr.rel target = $region3
    $region8: #{tpu_custom_call.1} parent=1 // loop_exit
      _
    %915 = vsyncpa [#allocation3], 1
    %s916 = scalar_lea.sflag [#allocation3], 1
    %917 = vsyncpa %s916, 1

</llo_original>
